<compile_context>
chip_gen: v7x
topology: tpu7x:2x2x1
jax: 0.10.0
libtpu: 0.0.40
codegen_flags: <defaults>
</compile_context>

<pallas_src>
import functools

import jax
import jax.numpy as jnp
from jax.experimental import pallas as pl
from jax.experimental.pallas import tpu as pltpu


_SUBLANE = 8
_MIB = 1024 * 1024


def _round_up(x: int, m: int) -> int:
    return (x + m - 1) // m * m


def _vmem_capacity_bytes() -> int:
    """Physical VMEM per TensorCore; falls back to the smallest gen (v7x, 64 MiB)."""
    try:
        cap = getattr(pltpu.get_tpu_info(), "vmem_capacity_bytes", None)
        if cap:
            return int(cap)
    except Exception:
        pass
    return 64 * _MIB


def _estimate_vmem_bytes(tn, d_in, d_code, x_bytes, w_bytes, out_bytes) -> int:
    """Conservative per-kernel VMEM estimate (assumes weights still 2x buffered)."""
    tiles = 2 * tn * d_in * (x_bytes + out_bytes)              # double-buffered x / out tiles
    weights = 2 * (2 * d_in * d_code * w_bytes + (d_in + d_code) * 4)
    scratch = tn * d_code * 4 + tn * d_in * 4                  # f32 enc / dec intermediates
    return int(tiles + weights + scratch)


def _pick_batch_tile(n, d_in, d_code, x_bytes, w_bytes, out_bytes, vmem_cap) -> int:
    budget = int(0.6 * vmem_cap)
    max_tn = 1024 if vmem_cap >= 100 * _MIB else 512           # v5e/v6e vs v7x
    tn = max_tn
    while tn > _SUBLANE and _estimate_vmem_bytes(
            tn, d_in, d_code, x_bytes, w_bytes, out_bytes) > budget:
        tn //= 2
    tn = max(_SUBLANE, _round_up(tn, _SUBLANE))
    if n <= tn:
        return n    # single full-extent block: always layout-legal, no waste
    return tn


def _weight_pipeline_modes():
    """Preferred: single-buffer the VMEM-resident weights; fallback: default."""
    modes = []
    try:
        modes.append(pl.Buffered(1))
    except Exception:
        pass
    modes.append(None)
    return modes


def _autoencoder_kernel(x_ref, we_ref, be_ref, wd_ref, bd_ref, out_ref, *,
                        nonlinear, compute_dtype):
    # x_ref : [tn, d_in]      batch tile (pipelined across the grid)
    # we_ref: [d_in, d_code]  encoder weight, pre-transposed to [in, out]
    # be_ref: [1, d_code]     encoder bias (f32)
    # wd_ref: [d_code, d_in]  decoder weight, pre-transposed to [in, out]
    # bd_ref: [1, d_in]       decoder bias (f32)
    enc = jnp.dot(x_ref[...], we_ref[...], preferred_element_type=jnp.float32)
    enc = enc + be_ref[...]
    if nonlinear:
        enc = jnp.maximum(enc, 0.0)
    dec = jnp.dot(enc.astype(compute_dtype), wd_ref[...],
                  preferred_element_type=jnp.float32)
    dec = dec + bd_ref[...]
    out_ref[...] = dec.astype(out_ref.dtype)


def autoencoder_forward(x, w_enc, b_enc, w_dec, b_dec, *,
                        nonlinear=False, compute_dtype=None):
    """Pallas forward pass of the Autoencoder.

    x:     [N, input_dim]
    w_enc: [code_dim, input_dim], b_enc: [code_dim]
    w_dec: [input_dim, code_dim], b_dec: [input_dim]
    compute_dtype: optional streaming/matmul dtype (e.g. jnp.bfloat16);
                   accumulation stays f32, output keeps x.dtype.
    returns [N, input_dim] with x.dtype
    """
    n, d_in = x.shape
    d_code = w_enc.shape[0]
    out_dtype = x.dtype
    cd = jnp.dtype(compute_dtype) if compute_dtype is not None else jnp.dtype(x.dtype)

    # One-time wrapper prep (tiny): transpose weights to [in, out], optional cast.
    x_c = x.astype(cd)
    we_t = jnp.transpose(w_enc).astype(cd)            # [d_in, d_code]
    wd_t = jnp.transpose(w_dec).astype(cd)            # [d_code, d_in]
    be2 = b_enc.reshape(1, d_code).astype(jnp.float32)
    bd2 = b_dec.reshape(1, d_in).astype(jnp.float32)

    x_bytes = cd.itemsize
    w_bytes = cd.itemsize
    out_bytes = jnp.dtype(out_dtype).itemsize

    vmem_cap = _vmem_capacity_bytes()
    tn = _pick_batch_tile(n, d_in, d_code, x_bytes, w_bytes, out_bytes, vmem_cap)
    est = _estimate_vmem_bytes(tn, d_in, d_code, x_bytes, w_bytes, out_bytes)
    vmem_limit = int(min(vmem_cap, max(2 * est, 32 * _MIB)))

    grid = (pl.cdiv(n, tn),)   # partial last block handled by Pallas; no batch padding
    kernel = functools.partial(_autoencoder_kernel, nonlinear=nonlinear, compute_dtype=cd)

    def make_call(weight_mode):
        def w_spec(shape):
            if weight_mode is None:
                return pl.BlockSpec(shape, lambda i: (0, 0))
            return pl.BlockSpec(shape, lambda i: (0, 0), pipeline_mode=weight_mode)

        return pl.pallas_call(
            kernel,
            out_shape=jax.ShapeDtypeStruct((n, d_in), out_dtype),
            grid_spec=pltpu.PrefetchScalarGridSpec(
                num_scalar_prefetch=0,
                grid=grid,
                in_specs=[
                    # batch tile: pipelined across the grid (full-extent feature dim)
                    pl.BlockSpec((tn, d_in), lambda i: (i, 0)),
                    # weights / biases: constant index_map -> VMEM resident
                    w_spec((d_in, d_code)),
                    w_spec((1, d_code)),
                    w_spec((d_code, d_in)),
                    w_spec((1, d_in)),
                ],
                out_specs=pl.BlockSpec((tn, d_in), lambda i: (i, 0)),
            ),
            compiler_params=pltpu.CompilerParams(
                dimension_semantics=("parallel",),   # batch axis shards across TCs (v7x)
                vmem_limit_bytes=vmem_limit,
            ),
        )

    last_err = None
    for mode in _weight_pipeline_modes():
        try:
            return make_call(mode)(x_c, we_t, be2, wd_t, bd2)
        except Exception as e:          # Buffered(1) unsupported on this build -> fallback
            last_err = e
    raise last_err


def _reference_forward(x, w_enc, b_enc, w_dec, b_dec, *, nonlinear=False, compute_dtype=None):
    cd = jnp.dtype(compute_dtype) if compute_dtype is not None else jnp.dtype(x.dtype)
    f32 = jnp.float32
    xf = x.astype(cd).astype(f32)
    wef = w_enc.astype(cd).astype(f32)
    wdf = w_dec.astype(cd).astype(f32)
    enc = xf @ wef.T + b_enc.astype(f32)
    if nonlinear:
        enc = jnp.maximum(enc, 0.0)
    enc = enc.astype(cd).astype(f32)
    dec = enc @ wdf.T + b_dec.astype(f32)
    return dec.astype(x.dtype)


def _init_linear(key, out_features, in_features):
    # Deterministic init mimicking torch.nn.Linear default (uniform +/- 1/sqrt(fan_in)).
    k_w, k_b = jax.random.split(key)
    bound = 1.0 / jnp.sqrt(jnp.float32(in_features))
    w = jax.random.uniform(k_w, (out_features, in_features), jnp.float32, -bound, bound)
    b = jax.random.uniform(k_b, (out_features,), jnp.float32, -bound, bound)
    return w, b


if __name__ == "__main__":
    key = jax.random.PRNGKey(0)
    k_x, k_enc, k_dec, k_x2 = jax.random.split(key, 4)

    # Pizza.csv columns 2:9 -> input_dim = 7; small code_dim and batch.
    batch = 8
    input_dim = 7
    code_dim = 3

    x = jax.random.normal(k_x, (batch, input_dim), jnp.float32)
    w_enc, b_enc = _init_linear(k_enc, code_dim, input_dim)
    w_dec, b_dec = _init_linear(k_dec, input_dim, code_dim)

    for nonlinear in (False, True):
        out = jax.block_until_ready(
            autoencoder_forward(x, w_enc, b_enc, w_dec, b_dec, nonlinear=nonlinear))
        ref = _reference_forward(x, w_enc, b_enc, w_dec, b_dec, nonlinear=nonlinear)
        assert out.shape == (batch, input_dim)
        assert out.dtype == x.dtype
        assert jnp.allclose(out, ref, atol=1e-5, rtol=1e-5), (
            f"mismatch (nonlinear={nonlinear})")

    # Larger, multi-tile batch that is NOT a multiple of the tile -> exercises the
    # cdiv grid with a partial last block (no wrapper padding / slicing).
    big_n = 1200
    x_big = jax.random.normal(k_x2, (big_n, input_dim), jnp.float32)
    out_big = jax.block_until_ready(
        autoencoder_forward(x_big, w_enc, b_enc, w_dec, b_dec, nonlinear=True))
    ref_big = _reference_forward(x_big, w_enc, b_enc, w_dec, b_dec, nonlinear=True)
    assert out_big.shape == (big_n, input_dim)
    assert jnp.allclose(out_big, ref_big, atol=1e-4, rtol=1e-4), "mismatch (big batch)"

    # bf16 streaming path: bf16 operands on the MXU, f32 accumulation, f32 output.
    out_bf = jax.block_until_ready(
        autoencoder_forward(x_big, w_enc, b_enc, w_dec, b_dec,
                            nonlinear=True, compute_dtype=jnp.bfloat16))
    ref_bf = _reference_forward(x_big, w_enc, b_enc, w_dec, b_dec,
                                nonlinear=True, compute_dtype=jnp.bfloat16)
    assert out_bf.shape == (big_n, input_dim)
    assert out_bf.dtype == x_big.dtype
    assert jnp.allclose(out_bf, ref_bf, atol=1e-2, rtol=1e-2), "mismatch (bf16 path)"

    print("KERNEL_OK")
</pallas_src>

<mosaic_0001>
module attributes {stable_mosaic.version = 11 : i64} {
  func.func @_autoencoder_kernel(%arg0: i32, %arg1: memref<8x7xf32, #tpu.memory_space<vmem>>, %arg2: memref<7x3xf32, #tpu.memory_space<vmem>>, %arg3: memref<1x3xf32, #tpu.memory_space<vmem>>, %arg4: memref<3x7xf32, #tpu.memory_space<vmem>>, %arg5: memref<1x7xf32, #tpu.memory_space<vmem>>, %arg6: memref<8x7xf32, #tpu.memory_space<vmem>>) attributes {dimension_semantics = [#tpu.dimension_semantics<parallel>], iteration_bounds = array<i64: 1>, scalar_prefetch = 0 : i64, scratch_operands = 0 : i64, tpu.core_type = #tpu.core_type<tc>, window_params = [{transform_indices = @transform_0, window_bounds = array<i64: 8, 7>}, {pipeline_mode = #tpu.pipeline_mode<synchronous>, transform_indices = @transform_1, window_bounds = array<i64: 7, 3>}, {pipeline_mode = #tpu.pipeline_mode<synchronous>, transform_indices = @transform_2, window_bounds = array<i64: 1, 3>}, {pipeline_mode = #tpu.pipeline_mode<synchronous>, transform_indices = @transform_3, window_bounds = array<i64: 3, 7>}, {pipeline_mode = #tpu.pipeline_mode<synchronous>, transform_indices = @transform_4, window_bounds = array<i64: 1, 7>}, {transform_indices = @transform_5, window_bounds = array<i64: 8, 7>}]} {
    %c0 = arith.constant 0 : index
    %c0_0 = arith.constant 0 : index
    %0 = vector.load %arg1[%c0, %c0_0] : memref<8x7xf32, #tpu.memory_space<vmem>>, vector<8x7xf32>
    %c0_1 = arith.constant 0 : index
    %c0_2 = arith.constant 0 : index
    %1 = vector.load %arg2[%c0_1, %c0_2] : memref<7x3xf32, #tpu.memory_space<vmem>>, vector<7x3xf32>
    %cst = arith.constant dense<0.000000e+00> : vector<8x3xf32>
    %2 = tpu.matmul %0, %1, %cst {dimension_numbers = #tpu.dot_dimension_numbers<[1], [0], [0], [1], [0, 0, 1, 1], [], []>} : vector<8x7xf32>, vector<7x3xf32>, vector<8x3xf32> -> vector<8x3xf32>
    %c0_3 = arith.constant 0 : index
    %c0_4 = arith.constant 0 : index
    %3 = vector.load %arg3[%c0_3, %c0_4] : memref<1x3xf32, #tpu.memory_space<vmem>>, vector<1x3xf32>
    %4 = vector.broadcast %3 : vector<1x3xf32> to vector<8x3xf32>
    %5 = arith.addf %2, %4 : vector<8x3xf32>
    %c0_5 = arith.constant 0 : index
    %c0_6 = arith.constant 0 : index
    %6 = vector.load %arg4[%c0_5, %c0_6] : memref<3x7xf32, #tpu.memory_space<vmem>>, vector<3x7xf32>
    %cst_7 = arith.constant dense<0.000000e+00> : vector<8x7xf32>
    %7 = tpu.matmul %5, %6, %cst_7 {dimension_numbers = #tpu.dot_dimension_numbers<[1], [0], [0], [1], [0, 0, 1, 1], [], []>} : vector<8x3xf32>, vector<3x7xf32>, vector<8x7xf32> -> vector<8x7xf32>
    %c0_8 = arith.constant 0 : index
    %c0_9 = arith.constant 0 : index
    %8 = vector.load %arg5[%c0_8, %c0_9] : memref<1x7xf32, #tpu.memory_space<vmem>>, vector<1x7xf32>
    %9 = vector.broadcast %8 : vector<1x7xf32> to vector<8x7xf32>
    %10 = arith.addf %7, %9 : vector<8x7xf32>
    %c0_10 = arith.constant 0 : index
    %c0_11 = arith.constant 0 : index
    %11 = vector.load %arg6[%c0_10, %c0_11] : memref<8x7xf32, #tpu.memory_space<vmem>>, vector<8x7xf32>
    tpu.vector_store %arg6[%c0_10, %c0_11], %10 {strides = array<i32>} : memref<8x7xf32, #tpu.memory_space<vmem>>, vector<8x7xf32>,
    return
  }
  func.func @transform_0(%arg0: i32) -> (i32, i32) {
    %c0_i32 = arith.constant 0 : i32
    %c0_i32_0 = arith.constant 0 : i32
    return %arg0, %c0_i32 : i32, i32
  }
  func.func @transform_1(%arg0: i32) -> (i32, i32) {
    %c0_i32 = arith.constant 0 : i32
    %c0_i32_0 = arith.constant 0 : i32
    %c0_i32_1 = arith.constant 0 : i32
    return %c0_i32, %c0_i32_0 : i32, i32
  }
  func.func @transform_2(%arg0: i32) -> (i32, i32) {
    %c0_i32 = arith.constant 0 : i32
    %c0_i32_0 = arith.constant 0 : i32
    %c0_i32_1 = arith.constant 0 : i32
    return %c0_i32, %c0_i32_0 : i32, i32
  }
  func.func @transform_3(%arg0: i32) -> (i32, i32) {
    %c0_i32 = arith.constant 0 : i32
    %c0_i32_0 = arith.constant 0 : i32
    %c0_i32_1 = arith.constant 0 : i32
    return %c0_i32, %c0_i32_0 : i32, i32
  }
  func.func @transform_4(%arg0: i32) -> (i32, i32) {
    %c0_i32 = arith.constant 0 : i32
    %c0_i32_0 = arith.constant 0 : i32
    %c0_i32_1 = arith.constant 0 : i32
    return %c0_i32, %c0_i32_0 : i32, i32
  }
  func.func @transform_5(%arg0: i32) -> (i32, i32) {
    %c0_i32 = arith.constant 0 : i32
    %c0_i32_0 = arith.constant 0 : i32
    return %arg0, %c0_i32 : i32, i32
  }
}

module attributes {stable_mosaic.version = 11 : i64} {
  func.func @_autoencoder_kernel(%arg0: i32, %arg1: memref<8x7xf32, #tpu.memory_space<vmem>>, %arg2: memref<7x3xf32, #tpu.memory_space<vmem>>, %arg3: memref<1x3xf32, #tpu.memory_space<vmem>>, %arg4: memref<3x7xf32, #tpu.memory_space<vmem>>, %arg5: memref<1x7xf32, #tpu.memory_space<vmem>>, %arg6: memref<8x7xf32, #tpu.memory_space<vmem>>) attributes {dimension_semantics = [#tpu.dimension_semantics<parallel>], iteration_bounds = array<i64: 1>, scalar_prefetch = 0 : i64, scratch_operands = 0 : i64, tpu.core_type = #tpu.core_type<tc>, window_params = [{transform_indices = @transform_0, window_bounds = array<i64: 8, 7>}, {pipeline_mode = #tpu.pipeline_mode<synchronous>, transform_indices = @transform_1, window_bounds = array<i64: 7, 3>}, {pipeline_mode = #tpu.pipeline_mode<synchronous>, transform_indices = @transform_2, window_bounds = array<i64: 1, 3>}, {pipeline_mode = #tpu.pipeline_mode<synchronous>, transform_indices = @transform_3, window_bounds = array<i64: 3, 7>}, {pipeline_mode = #tpu.pipeline_mode<synchronous>, transform_indices = @transform_4, window_bounds = array<i64: 1, 7>}, {transform_indices = @transform_5, window_bounds = array<i64: 8, 7>}]} {
    %c0 = arith.constant 0 : index
    %c0_0 = arith.constant 0 : index
    %0 = vector.load %arg1[%c0, %c0_0] : memref<8x7xf32, #tpu.memory_space<vmem>>, vector<8x7xf32>
    %c0_1 = arith.constant 0 : index
    %c0_2 = arith.constant 0 : index
    %1 = vector.load %arg2[%c0_1, %c0_2] : memref<7x3xf32, #tpu.memory_space<vmem>>, vector<7x3xf32>
    %cst = arith.constant dense<0.000000e+00> : vector<8x3xf32>
    %2 = tpu.matmul %0, %1, %cst {dimension_numbers = #tpu.dot_dimension_numbers<[1], [0], [0], [1], [0, 0, 1, 1], [], []>} : vector<8x7xf32>, vector<7x3xf32>, vector<8x3xf32> -> vector<8x3xf32>
    %c0_3 = arith.constant 0 : index
    %c0_4 = arith.constant 0 : index
    %3 = vector.load %arg3[%c0_3, %c0_4] : memref<1x3xf32, #tpu.memory_space<vmem>>, vector<1x3xf32>
    %4 = vector.broadcast %3 : vector<1x3xf32> to vector<8x3xf32>
    %5 = arith.addf %2, %4 : vector<8x3xf32>
    %c0_5 = arith.constant 0 : index
    %c0_6 = arith.constant 0 : index
    %6 = vector.load %arg4[%c0_5, %c0_6] : memref<3x7xf32, #tpu.memory_space<vmem>>, vector<3x7xf32>
    %cst_7 = arith.constant dense<0.000000e+00> : vector<8x7xf32>
    %7 = tpu.matmul %5, %6, %cst_7 {dimension_numbers = #tpu.dot_dimension_numbers<[1], [0], [0], [1], [0, 0, 1, 1], [], []>} : vector<8x3xf32>, vector<3x7xf32>, vector<8x7xf32> -> vector<8x7xf32>
    %c0_8 = arith.constant 0 : index
    %c0_9 = arith.constant 0 : index
    %8 = vector.load %arg5[%c0_8, %c0_9] : memref<1x7xf32, #tpu.memory_space<vmem>>, vector<1x7xf32>
    %9 = vector.broadcast %8 : vector<1x7xf32> to vector<8x7xf32>
    %10 = arith.addf %7, %9 : vector<8x7xf32>
    %c0_10 = arith.constant 0 : index
    %c0_11 = arith.constant 0 : index
    %11 = vector.load %arg6[%c0_10, %c0_11] : memref<8x7xf32, #tpu.memory_space<vmem>>, vector<8x7xf32>
    tpu.vector_store %arg6[%c0_10, %c0_11], %10 {strides = array<i32>} : memref<8x7xf32, #tpu.memory_space<vmem>>, vector<8x7xf32>,
    return
  }
  func.func @transform_0(%arg0: i32) -> (i32, i32) {
    %c0_i32 = arith.constant 0 : i32
    %c0_i32_0 = arith.constant 0 : i32
    return %arg0, %c0_i32 : i32, i32
  }
  func.func @transform_1(%arg0: i32) -> (i32, i32) {
    %c0_i32 = arith.constant 0 : i32
    %c0_i32_0 = arith.constant 0 : i32
    %c0_i32_1 = arith.constant 0 : i32
    return %c0_i32, %c0_i32_0 : i32, i32
  }
  func.func @transform_2(%arg0: i32) -> (i32, i32) {
    %c0_i32 = arith.constant 0 : i32
    %c0_i32_0 = arith.constant 0 : i32
    %c0_i32_1 = arith.constant 0 : i32
    return %c0_i32, %c0_i32_0 : i32, i32
  }
  func.func @transform_3(%arg0: i32) -> (i32, i32) {
    %c0_i32 = arith.constant 0 : i32
    %c0_i32_0 = arith.constant 0 : i32
    %c0_i32_1 = arith.constant 0 : i32
    return %c0_i32, %c0_i32_0 : i32, i32
  }
  func.func @transform_4(%arg0: i32) -> (i32, i32) {
    %c0_i32 = arith.constant 0 : i32
    %c0_i32_0 = arith.constant 0 : i32
    %c0_i32_1 = arith.constant 0 : i32
    return %c0_i32, %c0_i32_0 : i32, i32
  }
  func.func @transform_5(%arg0: i32) -> (i32, i32) {
    %c0_i32 = arith.constant 0 : i32
    %c0_i32_0 = arith.constant 0 : i32
    return %arg0, %c0_i32 : i32, i32
  }
}

</mosaic_0001>

<llo_original>
// kernel: tpu_custom_call.1
$region0: #{tpu_custom_call.1}
  #allocation0 [shape = 'u32[]', space=smem, size = 0x4, offset = 0x4, fixed_abs, tag = 'smem constant byte address 0x4 - core index']
  #allocation1 [shape = 'u32[144,128]{1,0:T(1,128)}', space=vmem, size = 0x12000, scoped, tag = 'internal scratch']
  %s0 = inlined_call_operand.vmem [shape: f32[8,7], index: 0, kind: input, shape index: {}]
  %s1 = inlined_call_operand.vmem [shape: f32[7,3], index: 1, kind: input, shape index: {}]
  %s2 = inlined_call_operand.vmem [shape: f32[1,3], index: 2, kind: input, shape index: {}]
  %s3 = inlined_call_operand.vmem [shape: f32[3,7], index: 3, kind: input, shape index: {}]
  %s4 = inlined_call_operand.vmem [shape: f32[1,7], index: 4, kind: input, shape index: {}]
  %s5 = inlined_call_operand.hbm [shape: f32[8,7], index: 5, kind: output, shape index: {}]
  %s6 = sld [smem:[#allocation0]]
  $region30: #{tpu_custom_call.1} parent=0
    _
  %s8 = ssub.s32 1, %s6
  %s9 = scalar_select 0, %s8, %s6
  $region1: #{tpu_custom_call.1} parent=0
    #allocation2 [shape = 'u8[4096]{0}', space=vmem, size = 0x1000, scoped, tag = 'output window, operand 0, single buffered']
    #allocation3 [shape = 's32[1]{0}', space=sflag, size = 0x4, scoped, tag = 'scoped memory for tpu_custom_call.1']
    %10 = vsyncpa [#allocation3], 0
    // Predicated region
    $region2: #{tpu_custom_call.1} parent=1 // pred_check
      _
    $region3: #{tpu_custom_call.1} parent=1 // pred_check_branch
      %12 = sbr.rel (0) target = $region5
    $region4: #{tpu_custom_call.1} parent=1 // pred_region
      _
    $region5: #{tpu_custom_call.1} parent=1 // pred_fallthru
      _
    // Predicated region
    $region6: #{tpu_custom_call.1} parent=1 // pred_check
      _
    $region7: #{tpu_custom_call.1} parent=1 // pred_check_branch
      %14 = sbr.rel (0) target = $region9
    $region8: #{tpu_custom_call.1} parent=1 // pred_region
      _
    $region9: #{tpu_custom_call.1} parent=1 // pred_fallthru
      _
    // Predicated region
    $region10: #{tpu_custom_call.1} parent=1 // pred_check
      _
    $region11: #{tpu_custom_call.1} parent=1 // pred_check_branch
      %16 = sbr.rel (0) target = $region13
    $region12: #{tpu_custom_call.1} parent=1 // pred_region
      _
    $region13: #{tpu_custom_call.1} parent=1 // pred_fallthru
      _
    // Predicated region
    $region14: #{tpu_custom_call.1} parent=1 // pred_check
      _
    $region15: #{tpu_custom_call.1} parent=1 // pred_check_branch
      %18 = sbr.rel (0) target = $region17
    $region16: #{tpu_custom_call.1} parent=1 // pred_region
      _
    $region17: #{tpu_custom_call.1} parent=1 // pred_fallthru
      _
    // Predicated region
    $region18: #{tpu_custom_call.1} parent=1 // pred_check
      _
    $region19: #{tpu_custom_call.1} parent=1 // pred_check_branch
      %20 = sbr.rel (0) target = $region21
    $region20: #{tpu_custom_call.1} parent=1 // pred_region
      _
    $region21: #{tpu_custom_call.1} parent=1 // pred_fallthru
      _
    %v21 = vld [vmem:[%s0] sm:$0xff]
    %v22 = vld [vmem:[%s1] sm:$0x7f]
    %v23 = vld [vmem:[%s2] sm:$0x1]
    %v25 = vlaneseq
    %v26 = vshrl.u32 %v25, 7
    %v27 = vsub.s32 0, %v26
    %v28 = vrot.slane %v23, %v27
    %vm30 = vcmask 56320
    %v32 = vsel %vm30, %v21, 0
    %vm34 = vcmask 1046528
    %v36 = vsel %vm34, %v22, 0
    %38 = vmatprep.subr.mxu0 0.0
    %39 = vmatpush1.msra.mxu0 %v36
    %40 = vmatprep.subr.mxu0 0.0
    %41 = vmatpush1.msra.mxu0 0.0
    %42 = vmatprep.subr.mxu0 0.0
    %43 = vmatpush1.msra.mxu0 0.0
    %44 = vmatprep.subr.mxu0 0.0
    %45 = vmatpush1.msra.mxu0 0.0
    %46 = vmatprep.subr.mxu0 0.0
    %47 = vmatpush1.msra.mxu0 0.0
    %48 = vmatprep.subr.mxu0 0.0
    %49 = vmatpush1.msra.mxu0 0.0
    %50 = vmatprep.subr.mxu0 0.0
    %51 = vmatpush1.msra.mxu0 0.0
    %52 = vmatprep.subr.mxu0 0.0
    %53 = vmatpush1.msra.mxu0 0.0
    %54 = vmatprep.subr.mxu0 0.0
    %55 = vmatpush1.msra.mxu0 0.0
    %56 = vmatprep.subr.mxu0 0.0
    %57 = vmatpush1.msra.mxu0 0.0
    %58 = vmatprep.subr.mxu0 0.0
    %59 = vmatpush1.msra.mxu0 0.0
    %60 = vmatprep.subr.mxu0 0.0
    %61 = vmatpush1.msra.mxu0 0.0
    %62 = vmatprep.subr.mxu0 0.0
    %63 = vmatpush1.msra.mxu0 0.0
    %64 = vmatprep.subr.mxu0 0.0
    %65 = vmatpush1.msra.mxu0 0.0
    %66 = vmatprep.subr.mxu0 0.0
    %67 = vmatpush1.msra.mxu0 0.0
    %68 = vmatprep.subr.mxu0 0.0
    %69 = vmatpush1.msra.mxu0 0.0
    %70 = vmatprep.subr.mxu0 0.0
    %71 = vmatpush1.msra.mxu0 0.0
    %72 = vmatprep.subr.mxu0 0.0
    %73 = vmatpush1.msra.mxu0 0.0
    %74 = vmatprep.subr.mxu0 0.0
    %75 = vmatpush1.msra.mxu0 0.0
    %76 = vmatprep.subr.mxu0 0.0
    %77 = vmatpush1.msra.mxu0 0.0
    %78 = vmatprep.subr.mxu0 0.0
    %79 = vmatpush1.msra.mxu0 0.0
    %80 = vmatprep.subr.mxu0 0.0
    %81 = vmatpush1.msra.mxu0 0.0
    %82 = vmatprep.subr.mxu0 0.0
    %83 = vmatpush1.msra.mxu0 0.0
    %84 = vmatprep.subr.mxu0 0.0
    %85 = vmatpush1.msra.mxu0 0.0
    %86 = vmatprep.subr.mxu0 0.0
    %87 = vmatpush1.msra.mxu0 0.0
    %88 = vmatprep.subr.mxu0 0.0
    %89 = vmatpush1.msra.mxu0 0.0
    %90 = vmatprep.subr.mxu0 0.0
    %91 = vmatpush1.msra.mxu0 0.0
    %92 = vmatprep.subr.mxu0 0.0
    %93 = vmatpush1.msra.mxu0 0.0
    %94 = vmatprep.subr.mxu0 0.0
    %95 = vmatpush1.msra.mxu0 0.0
    %96 = vmatprep.subr.mxu0 0.0
    %97 = vmatpush1.msra.mxu0 0.0
    %98 = vmatprep.subr.mxu0 0.0
    %99 = vmatpush1.msra.mxu0 0.0
    %100 = vmatprep.subr.mxu0 0.0
    %101 = vmatpush1.msra.mxu0 0.0
    %102 = vmatprep.mubr.f32.mxu0 0.0
    %103 = vmatmul.mubr.f32.gmra.mrb[0].mxu0 %v32
    %v104 = vpop.f32.mrb[0].mxu0
    %v105 = vadd.f32 %v28, %v104
    %v106 = vpop.f32.mrb[0].mxu0
    %107 = vdwg.mxu0
    %v108 = vld [vmem:[%s3] sm:$0x7]
    %v109 = vld [vmem:[%s4] sm:$0x1]
    %v111 = vlaneseq
    %v112 = vshrl.u32 %v111, 7
    %v113 = vsub.s32 0, %v112
    %v114 = vrot.slane %v109, %v113
    %vm116 = vcmask 23552
    %v118 = vsel %vm116, %v105, 0
    %vm120 = vcmask 1042432
    %v122 = vsel %vm120, %v108, 0
    %124 = vmatprep.subr.mxu0 0.0
    %125 = vmatpush1.msra.mxu0 %v122
    %126 = vmatprep.subr.mxu0 0.0
    %127 = vmatpush1.msra.mxu0 0.0
    %128 = vmatprep.subr.mxu0 0.0
    %129 = vmatpush1.msra.mxu0 0.0
    %130 = vmatprep.subr.mxu0 0.0
    %131 = vmatpush1.msra.mxu0 0.0
    %132 = vmatprep.subr.mxu0 0.0
    %133 = vmatpush1.msra.mxu0 0.0
    %134 = vmatprep.subr.mxu0 0.0
    %135 = vmatpush1.msra.mxu0 0.0
    %136 = vmatprep.subr.mxu0 0.0
    %137 = vmatpush1.msra.mxu0 0.0
    %138 = vmatprep.subr.mxu0 0.0
    %139 = vmatpush1.msra.mxu0 0.0
    %140 = vmatprep.subr.mxu0 0.0
    %141 = vmatpush1.msra.mxu0 0.0
    %142 = vmatprep.subr.mxu0 0.0
    %143 = vmatpush1.msra.mxu0 0.0
    %144 = vmatprep.subr.mxu0 0.0
    %145 = vmatpush1.msra.mxu0 0.0
    %146 = vmatprep.subr.mxu0 0.0
    %147 = vmatpush1.msra.mxu0 0.0
    %148 = vmatprep.subr.mxu0 0.0
    %149 = vmatpush1.msra.mxu0 0.0
    %150 = vmatprep.subr.mxu0 0.0
    %151 = vmatpush1.msra.mxu0 0.0
    %152 = vmatprep.subr.mxu0 0.0
    %153 = vmatpush1.msra.mxu0 0.0
    %154 = vmatprep.subr.mxu0 0.0
    %155 = vmatpush1.msra.mxu0 0.0
    %156 = vmatprep.subr.mxu0 0.0
    %157 = vmatpush1.msra.mxu0 0.0
    %158 = vmatprep.subr.mxu0 0.0
    %159 = vmatpush1.msra.mxu0 0.0
    %160 = vmatprep.subr.mxu0 0.0
    %161 = vmatpush1.msra.mxu0 0.0
    %162 = vmatprep.subr.mxu0 0.0
    %163 = vmatpush1.msra.mxu0 0.0
    %164 = vmatprep.subr.mxu0 0.0
    %165 = vmatpush1.msra.mxu0 0.0
    %166 = vmatprep.subr.mxu0 0.0
    %167 = vmatpush1.msra.mxu0 0.0
    %168 = vmatprep.subr.mxu0 0.0
    %169 = vmatpush1.msra.mxu0 0.0
    %170 = vmatprep.subr.mxu0 0.0
    %171 = vmatpush1.msra.mxu0 0.0
    %172 = vmatprep.subr.mxu0 0.0
    %173 = vmatpush1.msra.mxu0 0.0
    %174 = vmatprep.subr.mxu0 0.0
    %175 = vmatpush1.msra.mxu0 0.0
    %176 = vmatprep.subr.mxu0 0.0
    %177 = vmatpush1.msra.mxu0 0.0
    %178 = vmatprep.subr.mxu0 0.0
    %179 = vmatpush1.msra.mxu0 0.0
    %180 = vmatprep.subr.mxu0 0.0
    %181 = vmatpush1.msra.mxu0 0.0
    %182 = vmatprep.subr.mxu0 0.0
    %183 = vmatpush1.msra.mxu0 0.0
    %184 = vmatprep.subr.mxu0 0.0
    %185 = vmatpush1.msra.mxu0 0.0
    %186 = vmatprep.subr.mxu0 0.0
    %187 = vmatpush1.msra.mxu0 0.0
    %188 = vmatprep.mubr.f32.mxu0 0.0
    %189 = vmatmul.mubr.f32.gmra.mrb[0].mxu0 %v118
    %v190 = vpop.f32.mrb[0].mxu0
    %v191 = vadd.f32 %v114, %v190
    %v192 = vpop.f32.mrb[0].mxu0
    %193 = vdwg.mxu0
    %194 = vst.msk [vmem:[#allocation2] sm:$0xff] %vm30, %v191
    // Predicated region
    $region22: #{tpu_custom_call.1} parent=1 // pred_check
      _
    $region23: #{tpu_custom_call.1} parent=1 // pred_check_branch
      %196 = sbr.rel (0) target = $region25
    $region24: #{tpu_custom_call.1} parent=1 // pred_region
      %s198 = ssub.s32 128, 128
      %199 = vsyncadd [#allocation3], %s198
      %s201 = sshll.u32 [#allocation2], 4
      %s202 = int_to_ptr.vmem [resolvable:$true] %s201
      %204 = dma.vmem_to_hbm [thread:$0]  %s202, 128, %s5, [#allocation3]
    $region25: #{tpu_custom_call.1} parent=1 // pred_fallthru
      _
    // Predicated region
    $region26: #{tpu_custom_call.1} parent=1 // pred_check
      _
    $region27: #{tpu_custom_call.1} parent=1 // pred_check_branch
      %206 = sbr.rel (0) target = $region29
    $region28: #{tpu_custom_call.1} parent=1 // pred_region
      %207 = dma.done [#allocation3], 128
    $region29: #{tpu_custom_call.1} parent=1 // pred_fallthru
      _
    %208 = vsyncpa [#allocation3], 1

// kernel: tpu_custom_call.1
$region0: #{tpu_custom_call.1}
  #allocation0 [shape = 'u32[]', space=smem, size = 0x4, offset = 0x4, fixed_abs, tag = 'smem constant byte address 0x4 - core index']
  #allocation1 [shape = 'u32[144,128]{1,0:T(1,128)}', space=vmem, size = 0x12000, scoped, tag = 'internal scratch']
  %s0 = inlined_call_operand.vmem [shape: f32[8,7], index: 0, kind: input, shape index: {}]
  %s1 = inlined_call_operand.vmem [shape: f32[7,3], index: 1, kind: input, shape index: {}]
  %s2 = inlined_call_operand.vmem [shape: f32[1,3], index: 2, kind: input, shape index: {}]
  %s3 = inlined_call_operand.vmem [shape: f32[3,7], index: 3, kind: input, shape index: {}]
  %s4 = inlined_call_operand.vmem [shape: f32[1,7], index: 4, kind: input, shape index: {}]
  %s5 = inlined_call_operand.hbm [shape: f32[8,7], index: 5, kind: output, shape index: {}]
  %s6 = sld [smem:[#allocation0]]
  $region30: #{tpu_custom_call.1} parent=0
    _
  %s8 = ssub.s32 1, %s6
  %s9 = scalar_select 0, %s8, %s6
  $region1: #{tpu_custom_call.1} parent=0
    #allocation2 [shape = 'u8[4096]{0}', space=vmem, size = 0x1000, scoped, tag = 'output window, operand 0, single buffered']
    #allocation3 [shape = 's32[1]{0}', space=sflag, size = 0x4, scoped, tag = 'scoped memory for tpu_custom_call.1']
    %10 = vsyncpa [#allocation3], 0
    // Predicated region
    $region2: #{tpu_custom_call.1} parent=1 // pred_check
      _
    $region3: #{tpu_custom_call.1} parent=1 // pred_check_branch
      %12 = sbr.rel (0) target = $region5
    $region4: #{tpu_custom_call.1} parent=1 // pred_region
      _
    $region5: #{tpu_custom_call.1} parent=1 // pred_fallthru
      _
    // Predicated region
    $region6: #{tpu_custom_call.1} parent=1 // pred_check
      _
    $region7: #{tpu_custom_call.1} parent=1 // pred_check_branch
      %14 = sbr.rel (0) target = $region9
    $region8: #{tpu_custom_call.1} parent=1 // pred_region
      _
    $region9: #{tpu_custom_call.1} parent=1 // pred_fallthru
      _
    // Predicated region
    $region10: #{tpu_custom_call.1} parent=1 // pred_check
      _
    $region11: #{tpu_custom_call.1} parent=1 // pred_check_branch
      %16 = sbr.rel (0) target = $region13
    $region12: #{tpu_custom_call.1} parent=1 // pred_region
      _
    $region13: #{tpu_custom_call.1} parent=1 // pred_fallthru
      _
    // Predicated region
    $region14: #{tpu_custom_call.1} parent=1 // pred_check
      _
    $region15: #{tpu_custom_call.1} parent=1 // pred_check_branch
      %18 = sbr.rel (0) target = $region17
    $region16: #{tpu_custom_call.1} parent=1 // pred_region
      _
    $region17: #{tpu_custom_call.1} parent=1 // pred_fallthru
      _
    // Predicated region
    $region18: #{tpu_custom_call.1} parent=1 // pred_check
      _
    $region19: #{tpu_custom_call.1} parent=1 // pred_check_branch
      %20 = sbr.rel (0) target = $region21
    $region20: #{tpu_custom_call.1} parent=1 // pred_region
      _
    $region21: #{tpu_custom_call.1} parent=1 // pred_fallthru
      _
    %v21 = vld [vmem:[%s0] sm:$0xff]
    %v22 = vld [vmem:[%s1] sm:$0x7f]
    %v23 = vld [vmem:[%s2] sm:$0x1]
    %v25 = vlaneseq
    %v26 = vshrl.u32 %v25, 7
    %v27 = vsub.s32 0, %v26
    %v28 = vrot.slane %v23, %v27
    %vm30 = vcmask 56320
    %v32 = vsel %vm30, %v21, 0
    %vm34 = vcmask 1046528
    %v36 = vsel %vm34, %v22, 0
    %38 = vmatprep.subr.mxu0 0.0
    %39 = vmatpush1.msra.mxu0 %v36
    %40 = vmatprep.subr.mxu0 0.0
    %41 = vmatpush1.msra.mxu0 0.0
    %42 = vmatprep.subr.mxu0 0.0
    %43 = vmatpush1.msra.mxu0 0.0
    %44 = vmatprep.subr.mxu0 0.0
    %45 = vmatpush1.msra.mxu0 0.0
    %46 = vmatprep.subr.mxu0 0.0
    %47 = vmatpush1.msra.mxu0 0.0
    %48 = vmatprep.subr.mxu0 0.0
    %49 = vmatpush1.msra.mxu0 0.0
    %50 = vmatprep.subr.mxu0 0.0
    %51 = vmatpush1.msra.mxu0 0.0
    %52 = vmatprep.subr.mxu0 0.0
    %53 = vmatpush1.msra.mxu0 0.0
    %54 = vmatprep.subr.mxu0 0.0
    %55 = vmatpush1.msra.mxu0 0.0
    %56 = vmatprep.subr.mxu0 0.0
    %57 = vmatpush1.msra.mxu0 0.0
    %58 = vmatprep.subr.mxu0 0.0
    %59 = vmatpush1.msra.mxu0 0.0
    %60 = vmatprep.subr.mxu0 0.0
    %61 = vmatpush1.msra.mxu0 0.0
    %62 = vmatprep.subr.mxu0 0.0
    %63 = vmatpush1.msra.mxu0 0.0
    %64 = vmatprep.subr.mxu0 0.0
    %65 = vmatpush1.msra.mxu0 0.0
    %66 = vmatprep.subr.mxu0 0.0
    %67 = vmatpush1.msra.mxu0 0.0
    %68 = vmatprep.subr.mxu0 0.0
    %69 = vmatpush1.msra.mxu0 0.0
    %70 = vmatprep.subr.mxu0 0.0
    %71 = vmatpush1.msra.mxu0 0.0
    %72 = vmatprep.subr.mxu0 0.0
    %73 = vmatpush1.msra.mxu0 0.0
    %74 = vmatprep.subr.mxu0 0.0
    %75 = vmatpush1.msra.mxu0 0.0
    %76 = vmatprep.subr.mxu0 0.0
    %77 = vmatpush1.msra.mxu0 0.0
    %78 = vmatprep.subr.mxu0 0.0
    %79 = vmatpush1.msra.mxu0 0.0
    %80 = vmatprep.subr.mxu0 0.0
    %81 = vmatpush1.msra.mxu0 0.0
    %82 = vmatprep.subr.mxu0 0.0
    %83 = vmatpush1.msra.mxu0 0.0
    %84 = vmatprep.subr.mxu0 0.0
    %85 = vmatpush1.msra.mxu0 0.0
    %86 = vmatprep.subr.mxu0 0.0
    %87 = vmatpush1.msra.mxu0 0.0
    %88 = vmatprep.subr.mxu0 0.0
    %89 = vmatpush1.msra.mxu0 0.0
    %90 = vmatprep.subr.mxu0 0.0
    %91 = vmatpush1.msra.mxu0 0.0
    %92 = vmatprep.subr.mxu0 0.0
    %93 = vmatpush1.msra.mxu0 0.0
    %94 = vmatprep.subr.mxu0 0.0
    %95 = vmatpush1.msra.mxu0 0.0
    %96 = vmatprep.subr.mxu0 0.0
    %97 = vmatpush1.msra.mxu0 0.0
    %98 = vmatprep.subr.mxu0 0.0
    %99 = vmatpush1.msra.mxu0 0.0
    %100 = vmatprep.subr.mxu0 0.0
    %101 = vmatpush1.msra.mxu0 0.0
    %102 = vmatprep.mubr.f32.mxu0 0.0
    %103 = vmatmul.mubr.f32.gmra.mrb[0].mxu0 %v32
    %v104 = vpop.f32.mrb[0].mxu0
    %v105 = vadd.f32 %v28, %v104
    %v106 = vpop.f32.mrb[0].mxu0
    %107 = vdwg.mxu0
    %v108 = vld [vmem:[%s3] sm:$0x7]
    %v109 = vld [vmem:[%s4] sm:$0x1]
    %v111 = vlaneseq
    %v112 = vshrl.u32 %v111, 7
    %v113 = vsub.s32 0, %v112
    %v114 = vrot.slane %v109, %v113
    %vm116 = vcmask 23552
    %v118 = vsel %vm116, %v105, 0
    %vm120 = vcmask 1042432
    %v122 = vsel %vm120, %v108, 0
    %124 = vmatprep.subr.mxu0 0.0
    %125 = vmatpush1.msra.mxu0 %v122
    %126 = vmatprep.subr.mxu0 0.0
    %127 = vmatpush1.msra.mxu0 0.0
    %128 = vmatprep.subr.mxu0 0.0
    %129 = vmatpush1.msra.mxu0 0.0
    %130 = vmatprep.subr.mxu0 0.0
    %131 = vmatpush1.msra.mxu0 0.0
    %132 = vmatprep.subr.mxu0 0.0
    %133 = vmatpush1.msra.mxu0 0.0
    %134 = vmatprep.subr.mxu0 0.0
    %135 = vmatpush1.msra.mxu0 0.0
    %136 = vmatprep.subr.mxu0 0.0
    %137 = vmatpush1.msra.mxu0 0.0
    %138 = vmatprep.subr.mxu0 0.0
    %139 = vmatpush1.msra.mxu0 0.0
    %140 = vmatprep.subr.mxu0 0.0
    %141 = vmatpush1.msra.mxu0 0.0
    %142 = vmatprep.subr.mxu0 0.0
    %143 = vmatpush1.msra.mxu0 0.0
    %144 = vmatprep.subr.mxu0 0.0
    %145 = vmatpush1.msra.mxu0 0.0
    %146 = vmatprep.subr.mxu0 0.0
    %147 = vmatpush1.msra.mxu0 0.0
    %148 = vmatprep.subr.mxu0 0.0
    %149 = vmatpush1.msra.mxu0 0.0
    %150 = vmatprep.subr.mxu0 0.0
    %151 = vmatpush1.msra.mxu0 0.0
    %152 = vmatprep.subr.mxu0 0.0
    %153 = vmatpush1.msra.mxu0 0.0
    %154 = vmatprep.subr.mxu0 0.0
    %155 = vmatpush1.msra.mxu0 0.0
    %156 = vmatprep.subr.mxu0 0.0
    %157 = vmatpush1.msra.mxu0 0.0
    %158 = vmatprep.subr.mxu0 0.0
    %159 = vmatpush1.msra.mxu0 0.0
    %160 = vmatprep.subr.mxu0 0.0
    %161 = vmatpush1.msra.mxu0 0.0
    %162 = vmatprep.subr.mxu0 0.0
    %163 = vmatpush1.msra.mxu0 0.0
    %164 = vmatprep.subr.mxu0 0.0
    %165 = vmatpush1.msra.mxu0 0.0
    %166 = vmatprep.subr.mxu0 0.0
    %167 = vmatpush1.msra.mxu0 0.0
    %168 = vmatprep.subr.mxu0 0.0
    %169 = vmatpush1.msra.mxu0 0.0
    %170 = vmatprep.subr.mxu0 0.0
    %171 = vmatpush1.msra.mxu0 0.0
    %172 = vmatprep.subr.mxu0 0.0
    %173 = vmatpush1.msra.mxu0 0.0
    %174 = vmatprep.subr.mxu0 0.0
    %175 = vmatpush1.msra.mxu0 0.0
    %176 = vmatprep.subr.mxu0 0.0
    %177 = vmatpush1.msra.mxu0 0.0
    %178 = vmatprep.subr.mxu0 0.0
    %179 = vmatpush1.msra.mxu0 0.0
    %180 = vmatprep.subr.mxu0 0.0
    %181 = vmatpush1.msra.mxu0 0.0
    %182 = vmatprep.subr.mxu0 0.0
    %183 = vmatpush1.msra.mxu0 0.0
    %184 = vmatprep.subr.mxu0 0.0
    %185 = vmatpush1.msra.mxu0 0.0
    %186 = vmatprep.subr.mxu0 0.0
    %187 = vmatpush1.msra.mxu0 0.0
    %188 = vmatprep.mubr.f32.mxu0 0.0
    %189 = vmatmul.mubr.f32.gmra.mrb[0].mxu0 %v118
    %v190 = vpop.f32.mrb[0].mxu0
    %v191 = vadd.f32 %v114, %v190
    %v192 = vpop.f32.mrb[0].mxu0
    %193 = vdwg.mxu0
    %194 = vst.msk [vmem:[#allocation2] sm:$0xff] %vm30, %v191
    // Predicated region
    $region22: #{tpu_custom_call.1} parent=1 // pred_check
      _
    $region23: #{tpu_custom_call.1} parent=1 // pred_check_branch
      %196 = sbr.rel (0) target = $region25
    $region24: #{tpu_custom_call.1} parent=1 // pred_region
      %s198 = ssub.s32 128, 128
      %199 = vsyncadd [#allocation3], %s198
      %s201 = sshll.u32 [#allocation2], 4
      %s202 = int_to_ptr.vmem [resolvable:$true] %s201
      %204 = dma.vmem_to_hbm [thread:$0]  %s202, 128, %s5, [#allocation3]
    $region25: #{tpu_custom_call.1} parent=1 // pred_fallthru
      _
    // Predicated region
    $region26: #{tpu_custom_call.1} parent=1 // pred_check
      _
    $region27: #{tpu_custom_call.1} parent=1 // pred_check_branch
      %206 = sbr.rel (0) target = $region29
    $region28: #{tpu_custom_call.1} parent=1 // pred_region
      %207 = dma.done [#allocation3], 128
    $region29: #{tpu_custom_call.1} parent=1 // pred_fallthru
      _
    %208 = vsyncpa [#allocation3], 1

</llo_original>
